<compile_context>
chip_gen: v7x
topology: tpu7x:2x2x1
jax: 0.10.0
libtpu: 0.0.40
codegen_flags: <defaults>
</compile_context>

<pallas_src>
import functools

import jax
import jax.numpy as jnp
from jax.experimental import pallas as pl
from jax.experimental.pallas import tpu as pltpu

_HAS_BUFFERED = hasattr(pl, "Buffered")


def _round_up(x, m):
    return ((x + m - 1) // m) * m


def _vmem_capacity_bytes():
    """Physical VMEM of the current TPU generation (conservative fallback)."""
    try:
        return int(pltpu.get_tpu_info().vmem_capacity_bytes)
    except Exception:
        # Unknown / old jax: assume the smallest budget (v7x, 64 MiB per TC).
        return 64 << 20


def _choose_tile_n(n, d, h, c_pad, out_itemsize=4):
    """Largest node tile that fits comfortably in this generation's VMEM."""
    vmem_cap = _vmem_capacity_bytes()
    budget = int(vmem_cap * 0.85)
    # Resident operands; size assuming worst-case double buffering (2x).
    resident = 2 * ((d * h + h * c_pad) * 2 + (h + c_pad) * 4)
    # Streamed bytes per node row: double-buffered bf16 x tile + output tile.
    per_row = 2 * d * 2 + 2 * c_pad * out_itemsize
    avail = max(budget - resident, 1 << 20)
    # v7x (64 MiB VMEM): cap at 512 rows; v5e/v6e (128 MiB): allow 1024.
    candidates = (512, 256, 128, 64, 32, 16) if vmem_cap <= (80 << 20) \
        else (1024, 512, 256, 128, 64, 32, 16)
    tile = candidates[-1]
    for cand in candidates:
        if cand * per_row <= avail:
            tile = cand
            break
    # Never tile past the (16-rounded) node count; keep bf16 sublane packing.
    tile = min(tile, _round_up(max(n, 16), 16))
    return _round_up(tile, 16)


def _vmem_limit_bytes(tile_n, d, h, c_pad, out_itemsize):
    vmem_cap = _vmem_capacity_bytes()
    bytes_x = 2 * tile_n * d * 2                 # double-buffered bf16 features
    bytes_o = 2 * tile_n * c_pad * out_itemsize  # double-buffered logits
    bytes_w = 2 * ((d * h + h * c_pad) * 2 + (h + c_pad) * 4)  # weights (2x safe)
    need = int((bytes_x + bytes_o + bytes_w) * 1.25) + (2 << 20)
    return max(8 << 20, min(need, vmem_cap - (8 << 20)))


def _mlp_kernel(x_ref, w1_ref, b1_ref, w2_ref, b2_ref, o_ref):
    # x_ref : (TN, D)   bf16 feature tile (streamed)
    # w1_ref: (D,  H)   bf16 layer-1 weight (resident)
    # b1_ref: (1,  H)   f32  layer-1 bias
    # w2_ref: (H,  Cp)  bf16 layer-2 weight (resident, Cp % 128 == 0)
    # b2_ref: (1,  Cp)  f32  layer-2 bias
    # o_ref : (TN, Cp)  logits tile (lane-dense, unmasked stores)
    h = jnp.dot(x_ref[...], w1_ref[...], preferred_element_type=jnp.float32)
    h = jnp.maximum(h + b1_ref[...], 0.0)
    out = jnp.dot(h.astype(w2_ref.dtype), w2_ref[...],
                  preferred_element_type=jnp.float32)
    o_ref[...] = (out + b2_ref[...]).astype(o_ref.dtype)


@functools.lru_cache(maxsize=None)
def _build_call(tile_n, n_pad, d, h, c_pad, out_dtype, vmem_limit,
                single_buffer_weights):
    def resident(shape):
        idx = lambda i, _s=shape: (0,) * len(_s)
        if single_buffer_weights:
            # Constant index_map => DMA'd once; drop the dead second buffer.
            return pl.BlockSpec(shape, idx, pipeline_mode=pl.Buffered(1))
        return pl.BlockSpec(shape, idx)

    out_itemsize = jnp.dtype(out_dtype).itemsize
    cost = pl.CostEstimate(
        flops=2 * n_pad * (d * h + h * c_pad),
        transcendentals=0,
        bytes_accessed=(n_pad * d * 2                      # feature stream
                        + (d * h + h * c_pad) * 2          # bf16 weights
                        + (h + c_pad) * 4                  # f32 biases
                        + n_pad * c_pad * out_itemsize),   # logits writeback
    )

    return pl.pallas_call(
        _mlp_kernel,
        out_shape=jax.ShapeDtypeStruct((n_pad, c_pad), out_dtype),
        grid_spec=pltpu.PrefetchScalarGridSpec(
            num_scalar_prefetch=0,
            grid=(n_pad // tile_n,),
            in_specs=[
                pl.BlockSpec((tile_n, d), lambda i: (i, 0)),  # feature tile
                resident((d, h)),                             # W1
                resident((1, h)),                             # b1
                resident((h, c_pad)),                         # W2
                resident((1, c_pad)),                         # b2
            ],
            out_specs=pl.BlockSpec((tile_n, c_pad), lambda i: (i, 0)),
        ),
        compiler_params=pltpu.CompilerParams(
            dimension_semantics=("parallel",),   # megacore splits the N loop
            vmem_limit_bytes=vmem_limit,
        ),
        cost_estimate=cost,
    )


# ---------------------------------------------------------------------------
# Hoisted preparation (call once, reuse across the EWC forward/observe loop).
# ---------------------------------------------------------------------------
def prepare_params(w1, b1, w2, b2):
    """Cast weights to bf16 and pad the class dim to a lane-dense 128 multiple."""
    d, h = w1.shape
    h2, c = w2.shape
    assert h2 == h, "W1/W2 hidden dims mismatch"
    c_pad = _round_up(c, 128)

    w1_p = jnp.asarray(w1, jnp.bfloat16)
    b1_p = jnp.reshape(jnp.asarray(b1, jnp.float32), (1, h))
    w2_bf = jnp.asarray(w2, jnp.bfloat16)
    b2_f = jnp.reshape(jnp.asarray(b2, jnp.float32), (1, c))
    if c_pad != c:
        w2_p = jnp.pad(w2_bf, ((0, 0), (0, c_pad - c)))
        b2_p = jnp.pad(b2_f, ((0, 0), (0, c_pad - c)))
    else:
        w2_p, b2_p = w2_bf, b2_f

    return {"w1": w1_p, "b1": b1_p, "w2": w2_p, "b2": b2_p,
            "d": d, "h": h, "c": c, "c_pad": c_pad}


def prepare_features(features, tile_n):
    """Cast features to bf16 and pad N to a multiple of tile_n (once)."""
    n, d = features.shape
    n_pad = _round_up(max(n, tile_n), tile_n)
    x = features.astype(jnp.bfloat16)
    if n_pad != n:
        x = jnp.pad(x, ((0, n_pad - n), (0, 0)))
    return x, n


def forward_prepared(x_pad, n, params, *, tile_n, out_dtype=jnp.float32):
    """Run the fused MLP kernel on already-prepared (padded/cast) operands."""
    d, h, c, c_pad = params["d"], params["h"], params["c"], params["c_pad"]
    n_pad = x_pad.shape[0]
    assert n_pad % tile_n == 0 and x_pad.shape[1] == d

    out_itemsize = jnp.dtype(out_dtype).itemsize
    vmem_limit = _vmem_limit_bytes(tile_n, d, h, c_pad, out_itemsize)
    args = (x_pad, params["w1"], params["b1"], params["w2"], params["b2"])

    try:
        out_p = _build_call(tile_n, n_pad, d, h, c_pad, out_dtype, vmem_limit,
                            _HAS_BUFFERED)(*args)
    except Exception:
        if not _HAS_BUFFERED:
            raise
        # Fallback: this jax build doesn't support single-buffered BlockSpecs.
        out_p = _build_call(tile_n, n_pad, d, h, c_pad, out_dtype, vmem_limit,
                            False)(*args)

    # Padded node rows hold garbage logits (relu(b1)@W2+b2); this slice is
    # what keeps the result correct -- do not remove.
    return out_p[:n, :c]


def net_forward(features, w1, b1, w2, b2, *, tile_n=None, out_dtype=jnp.float32):
    """Convenience one-shot NET.forward (pads/casts per call; prefer the
    prepare_* + forward_prepared path when calling repeatedly)."""
    params = prepare_params(w1, b1, w2, b2)
    if tile_n is None:
        tile_n = _choose_tile_n(features.shape[0], params["d"], params["h"],
                                params["c_pad"], jnp.dtype(out_dtype).itemsize)
    x_pad, n = prepare_features(features, tile_n)
    return forward_prepared(x_pad, n, params, tile_n=tile_n, out_dtype=out_dtype)


def reference_forward(features, w1, b1, w2, b2):
    h = jnp.maximum(features @ w1 + b1, 0.0)
    return h @ w2 + b2


# TODO(synk): observe() (EWC fisher accumulation, quadratic penalty, Adam step)
# is a host-side autograd training loop; only forward() is a kernel candidate.

if __name__ == "__main__":
    key = jax.random.PRNGKey(0)
    k_x, k_w1, k_b1, k_w2, k_b2 = jax.random.split(key, 5)

    # Small shapes consistent with a node-feature MLP backbone.
    N, D, H, C = 16, 32, 64, 16   # nodes, in_dim, hidden, n_classes

    features = jax.random.normal(k_x, (N, D), dtype=jnp.float32)
    w1 = jax.random.normal(k_w1, (D, H), dtype=jnp.float32) * 0.1
    b1 = jax.random.normal(k_b1, (1, H), dtype=jnp.float32) * 0.01
    w2 = jax.random.normal(k_w2, (H, C), dtype=jnp.float32) * 0.1
    b2 = jax.random.normal(k_b2, (1, C), dtype=jnp.float32) * 0.01

    # --- hoisted/cached path: prepare once, reuse across repeated forwards ---
    params = prepare_params(w1, b1, w2, b2)
    tile_n = _choose_tile_n(N, params["d"], params["h"], params["c_pad"])
    x_pad, n = prepare_features(features, tile_n)

    out = jax.block_until_ready(forward_prepared(x_pad, n, params, tile_n=tile_n))
    out2 = jax.block_until_ready(forward_prepared(x_pad, n, params, tile_n=tile_n))

    ref = reference_forward(features, w1, b1, w2, b2)
    assert out.shape == (N, C)
    # bf16 feeds with f32 accumulation => loose tolerance vs f32 reference.
    assert jnp.allclose(out, ref, atol=5e-2, rtol=5e-2), "mismatch vs reference"
    assert jnp.allclose(out2, ref, atol=5e-2, rtol=5e-2), "cached-path mismatch"

    # --- convenience one-shot wrapper ---
    out3 = jax.block_until_ready(net_forward(features, w1, b1, w2, b2))
    assert jnp.allclose(out3, ref, atol=5e-2, rtol=5e-2), "wrapper mismatch"

    print("KERNEL_OK")
</pallas_src>

<mosaic_0001>
module attributes {stable_mosaic.version = 11 : i64} {
  func.func @_mlp_kernel(%arg0: i32, %arg1: memref<16x32xbf16, #tpu.memory_space<vmem>>, %arg2: memref<32x64xbf16, #tpu.memory_space<vmem>>, %arg3: memref<1x64xf32, #tpu.memory_space<vmem>>, %arg4: memref<64x128xbf16, #tpu.memory_space<vmem>>, %arg5: memref<1x128xf32, #tpu.memory_space<vmem>>, %arg6: memref<16x128xf32, #tpu.memory_space<vmem>>) attributes {dimension_semantics = [#tpu.dimension_semantics<parallel>], iteration_bounds = array<i64: 1>, scalar_prefetch = 0 : i64, scratch_operands = 0 : i64, tpu.core_type = #tpu.core_type<tc>, window_params = [{transform_indices = @transform_0, window_bounds = array<i64: 16, 32>}, {pipeline_mode = #tpu.pipeline_mode<synchronous>, transform_indices = @transform_1, window_bounds = array<i64: 32, 64>}, {pipeline_mode = #tpu.pipeline_mode<synchronous>, transform_indices = @transform_2, window_bounds = array<i64: 1, 64>}, {pipeline_mode = #tpu.pipeline_mode<synchronous>, transform_indices = @transform_3, window_bounds = array<i64: 64, 128>}, {pipeline_mode = #tpu.pipeline_mode<synchronous>, transform_indices = @transform_4, window_bounds = array<i64: 1, 128>}, {transform_indices = @transform_5, window_bounds = array<i64: 16, 128>}]} {
    %c0 = arith.constant 0 : index
    %c0_0 = arith.constant 0 : index
    %0 = vector.load %arg1[%c0, %c0_0] : memref<16x32xbf16, #tpu.memory_space<vmem>>, vector<16x32xbf16>
    %c0_1 = arith.constant 0 : index
    %c0_2 = arith.constant 0 : index
    %1 = vector.load %arg2[%c0_1, %c0_2] : memref<32x64xbf16, #tpu.memory_space<vmem>>, vector<32x64xbf16>
    %cst = arith.constant dense<0.000000e+00> : vector<16x64xf32>
    %2 = tpu.matmul %0, %1, %cst {dimension_numbers = #tpu.dot_dimension_numbers<[1], [0], [0], [1], [0, 0, 1, 1], [], []>} : vector<16x32xbf16>, vector<32x64xbf16>, vector<16x64xf32> -> vector<16x64xf32>
    %c0_3 = arith.constant 0 : index
    %c0_4 = arith.constant 0 : index
    %3 = vector.load %arg3[%c0_3, %c0_4] : memref<1x64xf32, #tpu.memory_space<vmem>>, vector<1x64xf32>
    %4 = vector.broadcast %3 : vector<1x64xf32> to vector<16x64xf32>
    %5 = arith.addf %2, %4 : vector<16x64xf32>
    %cst_5 = arith.constant 0.000000e+00 : f32
    %6 = vector.broadcast %cst_5 : f32 to vector<16x64xf32>
    %7 = arith.maximumf %5, %6 : vector<16x64xf32>
    %8 = arith.truncf %7 : vector<16x64xf32> to vector<16x64xbf16>
    %c0_6 = arith.constant 0 : index
    %c0_7 = arith.constant 0 : index
    %9 = vector.load %arg4[%c0_6, %c0_7] : memref<64x128xbf16, #tpu.memory_space<vmem>>, vector<64x128xbf16>
    %cst_8 = arith.constant dense<0.000000e+00> : vector<16x128xf32>
    %10 = tpu.matmul %8, %9, %cst_8 {dimension_numbers = #tpu.dot_dimension_numbers<[1], [0], [0], [1], [0, 0, 1, 1], [], []>} : vector<16x64xbf16>, vector<64x128xbf16>, vector<16x128xf32> -> vector<16x128xf32>
    %c0_9 = arith.constant 0 : index
    %c0_10 = arith.constant 0 : index
    %11 = vector.load %arg5[%c0_9, %c0_10] : memref<1x128xf32, #tpu.memory_space<vmem>>, vector<1x128xf32>
    %12 = vector.broadcast %11 : vector<1x128xf32> to vector<16x128xf32>
    %13 = arith.addf %10, %12 : vector<16x128xf32>
    %c0_11 = arith.constant 0 : index
    %c0_12 = arith.constant 0 : index
    %14 = vector.load %arg6[%c0_11, %c0_12] : memref<16x128xf32, #tpu.memory_space<vmem>>, vector<16x128xf32>
    tpu.vector_store %arg6[%c0_11, %c0_12], %13 {strides = array<i32>} : memref<16x128xf32, #tpu.memory_space<vmem>>, vector<16x128xf32>,
    return
  }
  func.func @transform_0(%arg0: i32) -> (i32, i32) {
    %c0_i32 = arith.constant 0 : i32
    %c0_i32_0 = arith.constant 0 : i32
    return %arg0, %c0_i32 : i32, i32
  }
  func.func @transform_1(%arg0: i32) -> (i32, i32) {
    %c0_i32 = arith.constant 0 : i32
    %c0_i32_0 = arith.constant 0 : i32
    %c0_i32_1 = arith.constant 0 : i32
    return %c0_i32, %c0_i32_0 : i32, i32
  }
  func.func @transform_2(%arg0: i32) -> (i32, i32) {
    %c0_i32 = arith.constant 0 : i32
    %c0_i32_0 = arith.constant 0 : i32
    %c0_i32_1 = arith.constant 0 : i32
    return %c0_i32, %c0_i32_0 : i32, i32
  }
  func.func @transform_3(%arg0: i32) -> (i32, i32) {
    %c0_i32 = arith.constant 0 : i32
    %c0_i32_0 = arith.constant 0 : i32
    %c0_i32_1 = arith.constant 0 : i32
    return %c0_i32, %c0_i32_0 : i32, i32
  }
  func.func @transform_4(%arg0: i32) -> (i32, i32) {
    %c0_i32 = arith.constant 0 : i32
    %c0_i32_0 = arith.constant 0 : i32
    %c0_i32_1 = arith.constant 0 : i32
    return %c0_i32, %c0_i32_0 : i32, i32
  }
  func.func @transform_5(%arg0: i32) -> (i32, i32) {
    %c0_i32 = arith.constant 0 : i32
    %c0_i32_0 = arith.constant 0 : i32
    return %arg0, %c0_i32 : i32, i32
  }
}

module attributes {stable_mosaic.version = 11 : i64} {
  func.func @_mlp_kernel(%arg0: i32, %arg1: memref<16x32xbf16, #tpu.memory_space<vmem>>, %arg2: memref<32x64xbf16, #tpu.memory_space<vmem>>, %arg3: memref<1x64xf32, #tpu.memory_space<vmem>>, %arg4: memref<64x128xbf16, #tpu.memory_space<vmem>>, %arg5: memref<1x128xf32, #tpu.memory_space<vmem>>, %arg6: memref<16x128xf32, #tpu.memory_space<vmem>>) attributes {dimension_semantics = [#tpu.dimension_semantics<parallel>], iteration_bounds = array<i64: 1>, scalar_prefetch = 0 : i64, scratch_operands = 0 : i64, tpu.core_type = #tpu.core_type<tc>, window_params = [{transform_indices = @transform_0, window_bounds = array<i64: 16, 32>}, {pipeline_mode = #tpu.pipeline_mode<synchronous>, transform_indices = @transform_1, window_bounds = array<i64: 32, 64>}, {pipeline_mode = #tpu.pipeline_mode<synchronous>, transform_indices = @transform_2, window_bounds = array<i64: 1, 64>}, {pipeline_mode = #tpu.pipeline_mode<synchronous>, transform_indices = @transform_3, window_bounds = array<i64: 64, 128>}, {pipeline_mode = #tpu.pipeline_mode<synchronous>, transform_indices = @transform_4, window_bounds = array<i64: 1, 128>}, {transform_indices = @transform_5, window_bounds = array<i64: 16, 128>}]} {
    %c0 = arith.constant 0 : index
    %c0_0 = arith.constant 0 : index
    %0 = vector.load %arg1[%c0, %c0_0] : memref<16x32xbf16, #tpu.memory_space<vmem>>, vector<16x32xbf16>
    %c0_1 = arith.constant 0 : index
    %c0_2 = arith.constant 0 : index
    %1 = vector.load %arg2[%c0_1, %c0_2] : memref<32x64xbf16, #tpu.memory_space<vmem>>, vector<32x64xbf16>
    %cst = arith.constant dense<0.000000e+00> : vector<16x64xf32>
    %2 = tpu.matmul %0, %1, %cst {dimension_numbers = #tpu.dot_dimension_numbers<[1], [0], [0], [1], [0, 0, 1, 1], [], []>} : vector<16x32xbf16>, vector<32x64xbf16>, vector<16x64xf32> -> vector<16x64xf32>
    %c0_3 = arith.constant 0 : index
    %c0_4 = arith.constant 0 : index
    %3 = vector.load %arg3[%c0_3, %c0_4] : memref<1x64xf32, #tpu.memory_space<vmem>>, vector<1x64xf32>
    %4 = vector.broadcast %3 : vector<1x64xf32> to vector<16x64xf32>
    %5 = arith.addf %2, %4 : vector<16x64xf32>
    %cst_5 = arith.constant 0.000000e+00 : f32
    %6 = vector.broadcast %cst_5 : f32 to vector<16x64xf32>
    %7 = arith.maximumf %5, %6 : vector<16x64xf32>
    %8 = arith.truncf %7 : vector<16x64xf32> to vector<16x64xbf16>
    %c0_6 = arith.constant 0 : index
    %c0_7 = arith.constant 0 : index
    %9 = vector.load %arg4[%c0_6, %c0_7] : memref<64x128xbf16, #tpu.memory_space<vmem>>, vector<64x128xbf16>
    %cst_8 = arith.constant dense<0.000000e+00> : vector<16x128xf32>
    %10 = tpu.matmul %8, %9, %cst_8 {dimension_numbers = #tpu.dot_dimension_numbers<[1], [0], [0], [1], [0, 0, 1, 1], [], []>} : vector<16x64xbf16>, vector<64x128xbf16>, vector<16x128xf32> -> vector<16x128xf32>
    %c0_9 = arith.constant 0 : index
    %c0_10 = arith.constant 0 : index
    %11 = vector.load %arg5[%c0_9, %c0_10] : memref<1x128xf32, #tpu.memory_space<vmem>>, vector<1x128xf32>
    %12 = vector.broadcast %11 : vector<1x128xf32> to vector<16x128xf32>
    %13 = arith.addf %10, %12 : vector<16x128xf32>
    %c0_11 = arith.constant 0 : index
    %c0_12 = arith.constant 0 : index
    %14 = vector.load %arg6[%c0_11, %c0_12] : memref<16x128xf32, #tpu.memory_space<vmem>>, vector<16x128xf32>
    tpu.vector_store %arg6[%c0_11, %c0_12], %13 {strides = array<i32>} : memref<16x128xf32, #tpu.memory_space<vmem>>, vector<16x128xf32>,
    return
  }
  func.func @transform_0(%arg0: i32) -> (i32, i32) {
    %c0_i32 = arith.constant 0 : i32
    %c0_i32_0 = arith.constant 0 : i32
    return %arg0, %c0_i32 : i32, i32
  }
  func.func @transform_1(%arg0: i32) -> (i32, i32) {
    %c0_i32 = arith.constant 0 : i32
    %c0_i32_0 = arith.constant 0 : i32
    %c0_i32_1 = arith.constant 0 : i32
    return %c0_i32, %c0_i32_0 : i32, i32
  }
  func.func @transform_2(%arg0: i32) -> (i32, i32) {
    %c0_i32 = arith.constant 0 : i32
    %c0_i32_0 = arith.constant 0 : i32
    %c0_i32_1 = arith.constant 0 : i32
    return %c0_i32, %c0_i32_0 : i32, i32
  }
  func.func @transform_3(%arg0: i32) -> (i32, i32) {
    %c0_i32 = arith.constant 0 : i32
    %c0_i32_0 = arith.constant 0 : i32
    %c0_i32_1 = arith.constant 0 : i32
    return %c0_i32, %c0_i32_0 : i32, i32
  }
  func.func @transform_4(%arg0: i32) -> (i32, i32) {
    %c0_i32 = arith.constant 0 : i32
    %c0_i32_0 = arith.constant 0 : i32
    %c0_i32_1 = arith.constant 0 : i32
    return %c0_i32, %c0_i32_0 : i32, i32
  }
  func.func @transform_5(%arg0: i32) -> (i32, i32) {
    %c0_i32 = arith.constant 0 : i32
    %c0_i32_0 = arith.constant 0 : i32
    return %arg0, %c0_i32 : i32, i32
  }
}

</mosaic_0001>

<llo_original>
// kernel: tpu_custom_call.1
$region0: #{tpu_custom_call.1}
  #allocation0 [shape = 'u32[]', space=smem, size = 0x4, offset = 0x4, fixed_abs, tag = 'smem constant byte address 0x4 - core index']
  #allocation1 [shape = 'u32[144,128]{1,0:T(1,128)}', space=vmem, size = 0x12000, scoped, tag = 'internal scratch']
  %s0 = inlined_call_operand.hbm [shape: bf16[16,32], index: 0, kind: input, shape index: {}]
  %s1 = inlined_call_operand.hbm [shape: bf16[32,64], index: 1, kind: input, shape index: {}]
  %s2 = inlined_call_operand.vmem [shape: f32[1,64], index: 2, kind: input, shape index: {}]
  %s3 = inlined_call_operand.hbm [shape: bf16[64,128], index: 3, kind: input, shape index: {}]
  %s4 = inlined_call_operand.vmem [shape: f32[1,128], index: 4, kind: input, shape index: {}]
  %s5 = inlined_call_operand.hbm [shape: f32[16,128], index: 5, kind: output, shape index: {}]
  %s6 = sld [smem:[#allocation0]]
  $region42: #{tpu_custom_call.1} parent=0
    _
  %s8 = ssub.s32 1, %s6
  %s9 = scalar_select 0, %s8, %s6
  $region1: #{tpu_custom_call.1} parent=0
    #allocation2 [shape = 'u8[4096]{0}', space=vmem, size = 0x1000, scoped, tag = 'input window, operand 0, single buffered']
    #allocation3 [shape = 's32[1]{0}', space=sflag, size = 0x4, scoped, tag = 'scoped memory for tpu_custom_call.1']
    #allocation4 [shape = 's32[1]{0}', space=sflag, size = 0x4, scoped, tag = 'scoped memory for tpu_custom_call.1']
    #allocation5 [shape = 'u8[8192]{0}', space=vmem, size = 0x2000, scoped, tag = 'input window, operand 1, single buffered']
    #allocation6 [shape = 's32[1]{0}', space=sflag, size = 0x4, scoped, tag = 'scoped memory for tpu_custom_call.1']
    #allocation7 [shape = 'u8[16384]{0}', space=vmem, size = 0x4000, scoped, tag = 'input window, operand 3, single buffered']
    #allocation8 [shape = 'u8[8192]{0}', space=vmem, size = 0x2000, scoped, tag = 'output window, operand 0, single buffered']
    %10 = vsyncpa [#allocation3], 0
    %11 = vsyncpa [#allocation6], 0
    %12 = vsyncpa [#allocation4], 0
    // Predicated region
    $region2: #{tpu_custom_call.1} parent=1 // pred_check
      _
    $region3: #{tpu_custom_call.1} parent=1 // pred_check_branch
      %14 = sbr.rel (0) target = $region5
    $region4: #{tpu_custom_call.1} parent=1 // pred_region
      %s16 = ssub.s32 128, 128
      %17 = vsyncadd [#allocation3], %s16
      %s18 = sshll.u32 [#allocation2], 4
      %s19 = int_to_ptr.vmem [resolvable:$true] %s18
      %24 = dma.hbm_to_vmem [thread:$0]  %s0, 128, %s19, [#allocation3], 64, 64, 4
    $region5: #{tpu_custom_call.1} parent=1 // pred_fallthru
      _
    // Predicated region
    $region6: #{tpu_custom_call.1} parent=1 // pred_check
      _
    $region7: #{tpu_custom_call.1} parent=1 // pred_check_branch
      %26 = sbr.rel (0) target = $region9
    $region8: #{tpu_custom_call.1} parent=1 // pred_region
      %s28 = ssub.s32 256, 256
      %29 = vsyncadd [#allocation6], %s28
      %s30 = sshll.u32 [#allocation5], 4
      %s31 = int_to_ptr.vmem [resolvable:$true] %s30
      %36 = dma.hbm_to_vmem [thread:$0]  %s1, 256, %s31, [#allocation6], 64, 64, 4
    $region9: #{tpu_custom_call.1} parent=1 // pred_fallthru
      _
    // Predicated region
    $region10: #{tpu_custom_call.1} parent=1 // pred_check
      _
    $region11: #{tpu_custom_call.1} parent=1 // pred_check_branch
      %38 = sbr.rel (0) target = $region13
    $region12: #{tpu_custom_call.1} parent=1 // pred_region
      _
    $region13: #{tpu_custom_call.1} parent=1 // pred_fallthru
      _
    // Predicated region
    $region14: #{tpu_custom_call.1} parent=1 // pred_check
      _
    $region15: #{tpu_custom_call.1} parent=1 // pred_check_branch
      %40 = sbr.rel (0) target = $region17
    $region16: #{tpu_custom_call.1} parent=1 // pred_region
      %s42 = ssub.s32 512, 512
      %43 = vsyncadd [#allocation6], %s42
      %s44 = sshll.u32 [#allocation7], 4
      %s45 = int_to_ptr.vmem [resolvable:$true] %s44
      %50 = dma.hbm_to_vmem [thread:$0]  %s3, 512, %s45, [#allocation6], 64, 64, 4
    $region17: #{tpu_custom_call.1} parent=1 // pred_fallthru
      _
    // Predicated region
    $region18: #{tpu_custom_call.1} parent=1 // pred_check
      _
    $region19: #{tpu_custom_call.1} parent=1 // pred_check_branch
      %52 = sbr.rel (0) target = $region21
    $region20: #{tpu_custom_call.1} parent=1 // pred_region
      _
    $region21: #{tpu_custom_call.1} parent=1 // pred_fallthru
      _
    // Predicated region
    $region22: #{tpu_custom_call.1} parent=1 // pred_check
      _
    $region23: #{tpu_custom_call.1} parent=1 // pred_check_branch
      %54 = sbr.rel (0) target = $region25
    $region24: #{tpu_custom_call.1} parent=1 // pred_region
      %55 = dma.done [#allocation3], 128
    $region25: #{tpu_custom_call.1} parent=1 // pred_fallthru
      _
    // Predicated region
    $region26: #{tpu_custom_call.1} parent=1 // pred_check
      _
    $region27: #{tpu_custom_call.1} parent=1 // pred_check_branch
      %57 = sbr.rel (0) target = $region29
    $region28: #{tpu_custom_call.1} parent=1 // pred_region
      %58 = dma.done [#allocation6], 256
    $region29: #{tpu_custom_call.1} parent=1 // pred_fallthru
      _
    // Predicated region
    $region30: #{tpu_custom_call.1} parent=1 // pred_check
      _
    $region31: #{tpu_custom_call.1} parent=1 // pred_check_branch
      %60 = sbr.rel (0) target = $region33
    $region32: #{tpu_custom_call.1} parent=1 // pred_region
      %61 = dma.done [#allocation6], 512
    $region33: #{tpu_custom_call.1} parent=1 // pred_fallthru
      _
    %v63 = vld [vmem:[#allocation2] sm:$0xf]
    %v64 = vld [vmem:[#allocation2 + $0x4] sm:$0xf]
    %v65 = vld [vmem:[#allocation5] sm:$0xf]
    %v66 = vld [vmem:[#allocation5 + $0x4] sm:$0xf]
    %v67 = vld [vmem:[#allocation5 + $0x8] sm:$0xf]
    %v68 = vld [vmem:[#allocation5 + $0xc] sm:$0xf]
    %v69 = vld [vmem:[%s2] sm:$0x1]
    %v71 = vlaneseq
    %v72 = vshrl.u32 %v71, 7
    %v73 = vsub.s32 0, %v72
    %v74 = vrot.slane %v69, %v73
    %v78 = vunpack.c.l.b16 %v63
    %v79 = vunpack.c.l.b16 %v64
    %v80 = vpack.c.b16 %v79, %v78
    %v85 = vunpack.c.l.b16 %v65
    %v86 = vunpack.c.l.b16 %v66
    %v87 = vunpack.c.l.b16 %v67
    %v88 = vunpack.c.l.b16 %v68
    %v89 = vpack.c.b16 %v86, %v85
    %v90 = vpack.c.b16 %v88, %v87
    %vm93 = vcmask 261120
    %v95 = vsel %vm93, %v80, 0
    %97 = vmatprep.subr.bf16.mxu0 0
    %98 = vmatpush1.bf16.msra.mxu0 %v89
    %99 = vmatprep.subr.bf16.mxu0 0
    %100 = vmatpush1.bf16.msra.mxu0 %v90
    %101 = vmatprep.subr.bf16.mxu0 0
    %102 = vmatpush1.bf16.msra.mxu0 0
    %103 = vmatprep.subr.bf16.mxu0 0
    %104 = vmatpush1.bf16.msra.mxu0 0
    %105 = vmatprep.subr.bf16.mxu0 0
    %106 = vmatpush1.bf16.msra.mxu0 0
    %107 = vmatprep.subr.bf16.mxu0 0
    %108 = vmatpush1.bf16.msra.mxu0 0
    %109 = vmatprep.subr.bf16.mxu0 0
    %110 = vmatpush1.bf16.msra.mxu0 0
    %111 = vmatprep.subr.bf16.mxu0 0
    %112 = vmatpush1.bf16.msra.mxu0 0
    %113 = vmatprep.subr.bf16.mxu0 0
    %114 = vmatpush1.bf16.msra.mxu0 0
    %115 = vmatprep.subr.bf16.mxu0 0
    %116 = vmatpush1.bf16.msra.mxu0 0
    %117 = vmatprep.subr.bf16.mxu0 0
    %118 = vmatpush1.bf16.msra.mxu0 0
    %119 = vmatprep.subr.bf16.mxu0 0
    %120 = vmatpush1.bf16.msra.mxu0 0
    %121 = vmatprep.subr.bf16.mxu0 0
    %122 = vmatpush1.bf16.msra.mxu0 0
    %123 = vmatprep.subr.bf16.mxu0 0
    %124 = vmatpush1.bf16.msra.mxu0 0
    %125 = vmatprep.subr.bf16.mxu0 0
    %126 = vmatpush1.bf16.msra.mxu0 0
    %127 = vmatprep.subr.bf16.mxu0 0
    %128 = vmatpush1.bf16.msra.mxu0 0
    %129 = vmatprep.mubr.bf16.mxu0 0
    %130 = vmatmul.mubr.bf16.gmra.mrb[0].mxu0 %v95
    %v131 = vpop.f32.mrb[0].mxu0
    %v132 = vadd.f32 %v74, %v131
    %v133 = vpop.f32.mrb[0].mxu0
    %v134 = vpop.f32.mrb[0].mxu0
    %v135 = vadd.f32 %v74, %v134
    %v136 = vpop.f32.mrb[0].mxu0
    %137 = vdwg.mxu0
    %v138 = vmax.f32 %v132, 0.0
    %v139 = vmax.f32 %v135, 0.0
    %v140 = vpack.c.bf16 %v139, %v138
    %v141 = vld [vmem:[#allocation7] sm:$0xf]
    %v142 = vld [vmem:[#allocation7 + $0x4] sm:$0xf]
    %v143 = vld [vmem:[#allocation7 + $0x8] sm:$0xf]
    %v144 = vld [vmem:[#allocation7 + $0xc] sm:$0xf]
    %v145 = vld [vmem:[#allocation7 + $0x10] sm:$0xf]
    %v146 = vld [vmem:[#allocation7 + $0x14] sm:$0xf]
    %v147 = vld [vmem:[#allocation7 + $0x18] sm:$0xf]
    %v148 = vld [vmem:[#allocation7 + $0x1c] sm:$0xf]
    %v149 = vld [vmem:[%s4] sm:$0x1]
    %v151 = vlaneseq
    %v152 = vshrl.u32 %v151, 7
    %v153 = vsub.s32 0, %v152
    %v154 = vrot.slane %v149, %v153
    %v164 = vunpack.c.l.b16 %v141
    %v165 = vunpack.c.l.b16 %v142
    %v166 = vunpack.c.l.b16 %v143
    %v167 = vunpack.c.l.b16 %v144
    %v168 = vunpack.c.l.b16 %v145
    %v169 = vunpack.c.l.b16 %v146
    %v170 = vunpack.c.l.b16 %v147
    %v171 = vunpack.c.l.b16 %v148
    %v172 = vpack.c.b16 %v165, %v164
    %v173 = vpack.c.b16 %v167, %v166
    %v174 = vpack.c.b16 %v169, %v168
    %v175 = vpack.c.b16 %v171, %v170
    %vm180 = vcmask 523264
    %v182 = vsel %vm180, %v140, 0
    %184 = vmatprep.subr.bf16.mxu0 0
    %185 = vmatpush1.bf16.msra.mxu0 %v172
    %186 = vmatprep.subr.bf16.mxu0 0
    %187 = vmatpush1.bf16.msra.mxu0 %v173
    %188 = vmatprep.subr.bf16.mxu0 0
    %189 = vmatpush1.bf16.msra.mxu0 %v174
    %190 = vmatprep.subr.bf16.mxu0 0
    %191 = vmatpush1.bf16.msra.mxu0 %v175
    %192 = vmatprep.subr.bf16.mxu0 0
    %193 = vmatpush1.bf16.msra.mxu0 0
    %194 = vmatprep.subr.bf16.mxu0 0
    %195 = vmatpush1.bf16.msra.mxu0 0
    %196 = vmatprep.subr.bf16.mxu0 0
    %197 = vmatpush1.bf16.msra.mxu0 0
    %198 = vmatprep.subr.bf16.mxu0 0
    %199 = vmatpush1.bf16.msra.mxu0 0
    %200 = vmatprep.subr.bf16.mxu0 0
    %201 = vmatpush1.bf16.msra.mxu0 0
    %202 = vmatprep.subr.bf16.mxu0 0
    %203 = vmatpush1.bf16.msra.mxu0 0
    %204 = vmatprep.subr.bf16.mxu0 0
    %205 = vmatpush1.bf16.msra.mxu0 0
    %206 = vmatprep.subr.bf16.mxu0 0
    %207 = vmatpush1.bf16.msra.mxu0 0
    %208 = vmatprep.subr.bf16.mxu0 0
    %209 = vmatpush1.bf16.msra.mxu0 0
    %210 = vmatprep.subr.bf16.mxu0 0
    %211 = vmatpush1.bf16.msra.mxu0 0
    %212 = vmatprep.subr.bf16.mxu0 0
    %213 = vmatpush1.bf16.msra.mxu0 0
    %214 = vmatprep.subr.bf16.mxu0 0
    %215 = vmatpush1.bf16.msra.mxu0 0
    %216 = vmatprep.mubr.bf16.mxu0 0
    %217 = vmatmul.mubr.bf16.gmra.mrb[0].mxu0 %v182
    %v218 = vpop.f32.mrb[0].mxu0
    %v219 = vadd.f32 %v154, %v218
    %v220 = vpop.f32.mrb[0].mxu0
    %v221 = vpop.f32.mrb[0].mxu0
    %v222 = vadd.f32 %v154, %v221
    %v223 = vpop.f32.mrb[0].mxu0
    %224 = vdwg.mxu0
    %225 = vst [vmem:[#allocation8] sm:$0xff] %v219
    %226 = vst [vmem:[#allocation8 + $0x8] sm:$0xff] %v222
    // Predicated region
    $region34: #{tpu_custom_call.1} parent=1 // pred_check
      _
    $region35: #{tpu_custom_call.1} parent=1 // pred_check_branch
      %228 = sbr.rel (0) target = $region37
    $region36: #{tpu_custom_call.1} parent=1 // pred_region
      %s230 = ssub.s32 256, 256
      %231 = vsyncadd [#allocation4], %s230
      %s232 = sshll.u32 [#allocation8], 4
      %s233 = int_to_ptr.vmem [resolvable:$true] %s232
      %238 = dma.vmem_to_hbm [thread:$0]  %s233, 256, %s5, [#allocation4], 128, 128, 8
    $region37: #{tpu_custom_call.1} parent=1 // pred_fallthru
      _
    // Predicated region
    $region38: #{tpu_custom_call.1} parent=1 // pred_check
      _
    $region39: #{tpu_custom_call.1} parent=1 // pred_check_branch
      %240 = sbr.rel (0) target = $region41
    $region40: #{tpu_custom_call.1} parent=1 // pred_region
      %241 = dma.done [#allocation4], 256
    $region41: #{tpu_custom_call.1} parent=1 // pred_fallthru
      _
    %242 = vsyncpa [#allocation3], 1
    %243 = vsyncpa [#allocation6], 1
    %244 = vsyncpa [#allocation4], 1

// kernel: tpu_custom_call.1
$region0: #{tpu_custom_call.1}
  #allocation0 [shape = 'u32[]', space=smem, size = 0x4, offset = 0x4, fixed_abs, tag = 'smem constant byte address 0x4 - core index']
  #allocation1 [shape = 'u32[144,128]{1,0:T(1,128)}', space=vmem, size = 0x12000, scoped, tag = 'internal scratch']
  %s0 = inlined_call_operand.hbm [shape: bf16[16,32], index: 0, kind: input, shape index: {}]
  %s1 = inlined_call_operand.hbm [shape: bf16[32,64], index: 1, kind: input, shape index: {}]
  %s2 = inlined_call_operand.vmem [shape: f32[1,64], index: 2, kind: input, shape index: {}]
  %s3 = inlined_call_operand.hbm [shape: bf16[64,128], index: 3, kind: input, shape index: {}]
  %s4 = inlined_call_operand.vmem [shape: f32[1,128], index: 4, kind: input, shape index: {}]
  %s5 = inlined_call_operand.hbm [shape: f32[16,128], index: 5, kind: output, shape index: {}]
  %s6 = sld [smem:[#allocation0]]
  $region42: #{tpu_custom_call.1} parent=0
    _
  %s8 = ssub.s32 1, %s6
  %s9 = scalar_select 0, %s8, %s6
  $region1: #{tpu_custom_call.1} parent=0
    #allocation2 [shape = 'u8[4096]{0}', space=vmem, size = 0x1000, scoped, tag = 'input window, operand 0, single buffered']
    #allocation3 [shape = 's32[1]{0}', space=sflag, size = 0x4, scoped, tag = 'scoped memory for tpu_custom_call.1']
    #allocation4 [shape = 's32[1]{0}', space=sflag, size = 0x4, scoped, tag = 'scoped memory for tpu_custom_call.1']
    #allocation5 [shape = 'u8[8192]{0}', space=vmem, size = 0x2000, scoped, tag = 'input window, operand 1, single buffered']
    #allocation6 [shape = 's32[1]{0}', space=sflag, size = 0x4, scoped, tag = 'scoped memory for tpu_custom_call.1']
    #allocation7 [shape = 'u8[16384]{0}', space=vmem, size = 0x4000, scoped, tag = 'input window, operand 3, single buffered']
    #allocation8 [shape = 'u8[8192]{0}', space=vmem, size = 0x2000, scoped, tag = 'output window, operand 0, single buffered']
    %10 = vsyncpa [#allocation3], 0
    %11 = vsyncpa [#allocation6], 0
    %12 = vsyncpa [#allocation4], 0
    // Predicated region
    $region2: #{tpu_custom_call.1} parent=1 // pred_check
      _
    $region3: #{tpu_custom_call.1} parent=1 // pred_check_branch
      %14 = sbr.rel (0) target = $region5
    $region4: #{tpu_custom_call.1} parent=1 // pred_region
      %s16 = ssub.s32 128, 128
      %17 = vsyncadd [#allocation3], %s16
      %s18 = sshll.u32 [#allocation2], 4
      %s19 = int_to_ptr.vmem [resolvable:$true] %s18
      %24 = dma.hbm_to_vmem [thread:$0]  %s0, 128, %s19, [#allocation3], 64, 64, 4
    $region5: #{tpu_custom_call.1} parent=1 // pred_fallthru
      _
    // Predicated region
    $region6: #{tpu_custom_call.1} parent=1 // pred_check
      _
    $region7: #{tpu_custom_call.1} parent=1 // pred_check_branch
      %26 = sbr.rel (0) target = $region9
    $region8: #{tpu_custom_call.1} parent=1 // pred_region
      %s28 = ssub.s32 256, 256
      %29 = vsyncadd [#allocation6], %s28
      %s30 = sshll.u32 [#allocation5], 4
      %s31 = int_to_ptr.vmem [resolvable:$true] %s30
      %36 = dma.hbm_to_vmem [thread:$0]  %s1, 256, %s31, [#allocation6], 64, 64, 4
    $region9: #{tpu_custom_call.1} parent=1 // pred_fallthru
      _
    // Predicated region
    $region10: #{tpu_custom_call.1} parent=1 // pred_check
      _
    $region11: #{tpu_custom_call.1} parent=1 // pred_check_branch
      %38 = sbr.rel (0) target = $region13
    $region12: #{tpu_custom_call.1} parent=1 // pred_region
      _
    $region13: #{tpu_custom_call.1} parent=1 // pred_fallthru
      _
    // Predicated region
    $region14: #{tpu_custom_call.1} parent=1 // pred_check
      _
    $region15: #{tpu_custom_call.1} parent=1 // pred_check_branch
      %40 = sbr.rel (0) target = $region17
    $region16: #{tpu_custom_call.1} parent=1 // pred_region
      %s42 = ssub.s32 512, 512
      %43 = vsyncadd [#allocation6], %s42
      %s44 = sshll.u32 [#allocation7], 4
      %s45 = int_to_ptr.vmem [resolvable:$true] %s44
      %50 = dma.hbm_to_vmem [thread:$0]  %s3, 512, %s45, [#allocation6], 64, 64, 4
    $region17: #{tpu_custom_call.1} parent=1 // pred_fallthru
      _
    // Predicated region
    $region18: #{tpu_custom_call.1} parent=1 // pred_check
      _
    $region19: #{tpu_custom_call.1} parent=1 // pred_check_branch
      %52 = sbr.rel (0) target = $region21
    $region20: #{tpu_custom_call.1} parent=1 // pred_region
      _
    $region21: #{tpu_custom_call.1} parent=1 // pred_fallthru
      _
    // Predicated region
    $region22: #{tpu_custom_call.1} parent=1 // pred_check
      _
    $region23: #{tpu_custom_call.1} parent=1 // pred_check_branch
      %54 = sbr.rel (0) target = $region25
    $region24: #{tpu_custom_call.1} parent=1 // pred_region
      %55 = dma.done [#allocation3], 128
    $region25: #{tpu_custom_call.1} parent=1 // pred_fallthru
      _
    // Predicated region
    $region26: #{tpu_custom_call.1} parent=1 // pred_check
      _
    $region27: #{tpu_custom_call.1} parent=1 // pred_check_branch
      %57 = sbr.rel (0) target = $region29
    $region28: #{tpu_custom_call.1} parent=1 // pred_region
      %58 = dma.done [#allocation6], 256
    $region29: #{tpu_custom_call.1} parent=1 // pred_fallthru
      _
    // Predicated region
    $region30: #{tpu_custom_call.1} parent=1 // pred_check
      _
    $region31: #{tpu_custom_call.1} parent=1 // pred_check_branch
      %60 = sbr.rel (0) target = $region33
    $region32: #{tpu_custom_call.1} parent=1 // pred_region
      %61 = dma.done [#allocation6], 512
    $region33: #{tpu_custom_call.1} parent=1 // pred_fallthru
      _
    %v63 = vld [vmem:[#allocation2] sm:$0xf]
    %v64 = vld [vmem:[#allocation2 + $0x4] sm:$0xf]
    %v65 = vld [vmem:[#allocation5] sm:$0xf]
    %v66 = vld [vmem:[#allocation5 + $0x4] sm:$0xf]
    %v67 = vld [vmem:[#allocation5 + $0x8] sm:$0xf]
    %v68 = vld [vmem:[#allocation5 + $0xc] sm:$0xf]
    %v69 = vld [vmem:[%s2] sm:$0x1]
    %v71 = vlaneseq
    %v72 = vshrl.u32 %v71, 7
    %v73 = vsub.s32 0, %v72
    %v74 = vrot.slane %v69, %v73
    %v78 = vunpack.c.l.b16 %v63
    %v79 = vunpack.c.l.b16 %v64
    %v80 = vpack.c.b16 %v79, %v78
    %v85 = vunpack.c.l.b16 %v65
    %v86 = vunpack.c.l.b16 %v66
    %v87 = vunpack.c.l.b16 %v67
    %v88 = vunpack.c.l.b16 %v68
    %v89 = vpack.c.b16 %v86, %v85
    %v90 = vpack.c.b16 %v88, %v87
    %vm93 = vcmask 261120
    %v95 = vsel %vm93, %v80, 0
    %97 = vmatprep.subr.bf16.mxu0 0
    %98 = vmatpush1.bf16.msra.mxu0 %v89
    %99 = vmatprep.subr.bf16.mxu0 0
    %100 = vmatpush1.bf16.msra.mxu0 %v90
    %101 = vmatprep.subr.bf16.mxu0 0
    %102 = vmatpush1.bf16.msra.mxu0 0
    %103 = vmatprep.subr.bf16.mxu0 0
    %104 = vmatpush1.bf16.msra.mxu0 0
    %105 = vmatprep.subr.bf16.mxu0 0
    %106 = vmatpush1.bf16.msra.mxu0 0
    %107 = vmatprep.subr.bf16.mxu0 0
    %108 = vmatpush1.bf16.msra.mxu0 0
    %109 = vmatprep.subr.bf16.mxu0 0
    %110 = vmatpush1.bf16.msra.mxu0 0
    %111 = vmatprep.subr.bf16.mxu0 0
    %112 = vmatpush1.bf16.msra.mxu0 0
    %113 = vmatprep.subr.bf16.mxu0 0
    %114 = vmatpush1.bf16.msra.mxu0 0
    %115 = vmatprep.subr.bf16.mxu0 0
    %116 = vmatpush1.bf16.msra.mxu0 0
    %117 = vmatprep.subr.bf16.mxu0 0
    %118 = vmatpush1.bf16.msra.mxu0 0
    %119 = vmatprep.subr.bf16.mxu0 0
    %120 = vmatpush1.bf16.msra.mxu0 0
    %121 = vmatprep.subr.bf16.mxu0 0
    %122 = vmatpush1.bf16.msra.mxu0 0
    %123 = vmatprep.subr.bf16.mxu0 0
    %124 = vmatpush1.bf16.msra.mxu0 0
    %125 = vmatprep.subr.bf16.mxu0 0
    %126 = vmatpush1.bf16.msra.mxu0 0
    %127 = vmatprep.subr.bf16.mxu0 0
    %128 = vmatpush1.bf16.msra.mxu0 0
    %129 = vmatprep.mubr.bf16.mxu0 0
    %130 = vmatmul.mubr.bf16.gmra.mrb[0].mxu0 %v95
    %v131 = vpop.f32.mrb[0].mxu0
    %v132 = vadd.f32 %v74, %v131
    %v133 = vpop.f32.mrb[0].mxu0
    %v134 = vpop.f32.mrb[0].mxu0
    %v135 = vadd.f32 %v74, %v134
    %v136 = vpop.f32.mrb[0].mxu0
    %137 = vdwg.mxu0
    %v138 = vmax.f32 %v132, 0.0
    %v139 = vmax.f32 %v135, 0.0
    %v140 = vpack.c.bf16 %v139, %v138
    %v141 = vld [vmem:[#allocation7] sm:$0xf]
    %v142 = vld [vmem:[#allocation7 + $0x4] sm:$0xf]
    %v143 = vld [vmem:[#allocation7 + $0x8] sm:$0xf]
    %v144 = vld [vmem:[#allocation7 + $0xc] sm:$0xf]
    %v145 = vld [vmem:[#allocation7 + $0x10] sm:$0xf]
    %v146 = vld [vmem:[#allocation7 + $0x14] sm:$0xf]
    %v147 = vld [vmem:[#allocation7 + $0x18] sm:$0xf]
    %v148 = vld [vmem:[#allocation7 + $0x1c] sm:$0xf]
    %v149 = vld [vmem:[%s4] sm:$0x1]
    %v151 = vlaneseq
    %v152 = vshrl.u32 %v151, 7
    %v153 = vsub.s32 0, %v152
    %v154 = vrot.slane %v149, %v153
    %v164 = vunpack.c.l.b16 %v141
    %v165 = vunpack.c.l.b16 %v142
    %v166 = vunpack.c.l.b16 %v143
    %v167 = vunpack.c.l.b16 %v144
    %v168 = vunpack.c.l.b16 %v145
    %v169 = vunpack.c.l.b16 %v146
    %v170 = vunpack.c.l.b16 %v147
    %v171 = vunpack.c.l.b16 %v148
    %v172 = vpack.c.b16 %v165, %v164
    %v173 = vpack.c.b16 %v167, %v166
    %v174 = vpack.c.b16 %v169, %v168
    %v175 = vpack.c.b16 %v171, %v170
    %vm180 = vcmask 523264
    %v182 = vsel %vm180, %v140, 0
    %184 = vmatprep.subr.bf16.mxu0 0
    %185 = vmatpush1.bf16.msra.mxu0 %v172
    %186 = vmatprep.subr.bf16.mxu0 0
    %187 = vmatpush1.bf16.msra.mxu0 %v173
    %188 = vmatprep.subr.bf16.mxu0 0
    %189 = vmatpush1.bf16.msra.mxu0 %v174
    %190 = vmatprep.subr.bf16.mxu0 0
    %191 = vmatpush1.bf16.msra.mxu0 %v175
    %192 = vmatprep.subr.bf16.mxu0 0
    %193 = vmatpush1.bf16.msra.mxu0 0
    %194 = vmatprep.subr.bf16.mxu0 0
    %195 = vmatpush1.bf16.msra.mxu0 0
    %196 = vmatprep.subr.bf16.mxu0 0
    %197 = vmatpush1.bf16.msra.mxu0 0
    %198 = vmatprep.subr.bf16.mxu0 0
    %199 = vmatpush1.bf16.msra.mxu0 0
    %200 = vmatprep.subr.bf16.mxu0 0
    %201 = vmatpush1.bf16.msra.mxu0 0
    %202 = vmatprep.subr.bf16.mxu0 0
    %203 = vmatpush1.bf16.msra.mxu0 0
    %204 = vmatprep.subr.bf16.mxu0 0
    %205 = vmatpush1.bf16.msra.mxu0 0
    %206 = vmatprep.subr.bf16.mxu0 0
    %207 = vmatpush1.bf16.msra.mxu0 0
    %208 = vmatprep.subr.bf16.mxu0 0
    %209 = vmatpush1.bf16.msra.mxu0 0
    %210 = vmatprep.subr.bf16.mxu0 0
    %211 = vmatpush1.bf16.msra.mxu0 0
    %212 = vmatprep.subr.bf16.mxu0 0
    %213 = vmatpush1.bf16.msra.mxu0 0
    %214 = vmatprep.subr.bf16.mxu0 0
    %215 = vmatpush1.bf16.msra.mxu0 0
    %216 = vmatprep.mubr.bf16.mxu0 0
    %217 = vmatmul.mubr.bf16.gmra.mrb[0].mxu0 %v182
    %v218 = vpop.f32.mrb[0].mxu0
    %v219 = vadd.f32 %v154, %v218
    %v220 = vpop.f32.mrb[0].mxu0
    %v221 = vpop.f32.mrb[0].mxu0
    %v222 = vadd.f32 %v154, %v221
    %v223 = vpop.f32.mrb[0].mxu0
    %224 = vdwg.mxu0
    %225 = vst [vmem:[#allocation8] sm:$0xff] %v219
    %226 = vst [vmem:[#allocation8 + $0x8] sm:$0xff] %v222
    // Predicated region
    $region34: #{tpu_custom_call.1} parent=1 // pred_check
      _
    $region35: #{tpu_custom_call.1} parent=1 // pred_check_branch
      %228 = sbr.rel (0) target = $region37
    $region36: #{tpu_custom_call.1} parent=1 // pred_region
      %s230 = ssub.s32 256, 256
      %231 = vsyncadd [#allocation4], %s230
      %s232 = sshll.u32 [#allocation8], 4
      %s233 = int_to_ptr.vmem [resolvable:$true] %s232
      %238 = dma.vmem_to_hbm [thread:$0]  %s233, 256, %s5, [#allocation4], 128, 128, 8
    $region37: #{tpu_custom_call.1} parent=1 // pred_fallthru
      _
    // Predicated region
    $region38: #{tpu_custom_call.1} parent=1 // pred_check
      _
    $region39: #{tpu_custom_call.1} parent=1 // pred_check_branch
      %240 = sbr.rel (0) target = $region41
    $region40: #{tpu_custom_call.1} parent=1 // pred_region
      %241 = dma.done [#allocation4], 256
    $region41: #{tpu_custom_call.1} parent=1 // pred_fallthru
      _
    %242 = vsyncpa [#allocation3], 1
    %243 = vsyncpa [#allocation6], 1
    %244 = vsyncpa [#allocation4], 1

</llo_original>
